<compile_context>
chip_gen: v7x
topology: tpu7x:2x2x1
jax: 0.10.0
libtpu: 0.0.40
codegen_flags: <defaults>
</compile_context>

<pallas_src>
import functools

import jax
import jax.numpy as jnp
from jax.experimental import pallas as pl
from jax.experimental.pallas import tpu as pltpu


# ---------------------------------------------------------------------------
# Kernel: one (TM, D) row tile per outer grid step, d_ff reduced over axis 1.
# ---------------------------------------------------------------------------
def ffn_kernel(x_ref, w1_ref, b1_ref, w2_ref, b2_ref, out_ref, acc_ref):
    j = pl.program_id(1)

    @pl.when(j == 0)
    def _():
        acc_ref[...] = jnp.zeros_like(acc_ref)

    # linear_1 chunk: (TM, D) @ (D, TF) -> (TM, TF), bf16 operands, f32 acc.
    x = x_ref[...].astype(jnp.bfloat16)
    h = jnp.dot(x, w1_ref[...], preferred_element_type=jnp.float32)
    h = h + b1_ref[...]                     # bias in f32
    h = jnp.maximum(h, 0.0)                 # ReLU
    # TODO(synk): dropout skipped (eval / inference mode -> identity).

    # linear_2 partial sum: (TM, TF) @ (TF, D) accumulated in f32 scratch.
    acc_ref[...] += jnp.dot(h.astype(jnp.bfloat16), w2_ref[...],
                            preferred_element_type=jnp.float32)

    @pl.when(j == pl.num_programs(1) - 1)
    def _():
        out_ref[...] = (acc_ref[...] + b2_ref[...]).astype(out_ref.dtype)


# ---------------------------------------------------------------------------
# Wrapper
# ---------------------------------------------------------------------------
def _pick_tile(total, preferred, align):
    """Largest tile <= preferred that divides `total` (multiple of `align`)."""
    if total <= preferred:
        return total
    t = (preferred // align) * align
    while t > align and total % t != 0:
        t -= align
    return t if total % t == 0 else total


def feedforward_pallas(x, w1, b1, w2, b2, *, tm=256, tf=512):
    """x: (B, S, D) or (M, D).  w1: (D, Dff), b1: (1, Dff), w2: (Dff, D), b2: (1, D)."""
    orig_shape = x.shape
    D = x.shape[-1]
    x2 = x.reshape(-1, D)                      # lane-dense (M, D) slab
    M = x2.shape[0]
    Dff = w1.shape[1]

    TM = _pick_tile(M, tm, 8)
    TF = _pick_tile(Dff, tf, 128)
    grid = (M // TM, Dff // TF)

    # bf16 weights at the boundary: half the weight DMA bytes, MXU-native.
    w1b = w1.astype(jnp.bfloat16)
    w2b = w2.astype(jnp.bfloat16)

    cost = pl.CostEstimate(
        flops=4 * M * D * Dff,
        transcendentals=0,
        bytes_accessed=(x2.size * 4 + w1b.size * 2 + w2b.size * 2
                        + b1.size * 4 + b2.size * 4 + M * D * 4),
    )

    out = pl.pallas_call(
        ffn_kernel,
        out_shape=jax.ShapeDtypeStruct((M, D), x.dtype),
        grid=grid,
        in_specs=[
            pl.BlockSpec((TM, D), lambda i, j: (i, 0)),    # x row tile
            pl.BlockSpec((D, TF), lambda i, j: (0, j)),    # W1 column chunk
            pl.BlockSpec((1, TF), lambda i, j: (0, j)),    # b1 chunk
            pl.BlockSpec((TF, D), lambda i, j: (j, 0)),    # W2 row chunk
            pl.BlockSpec((1, D), lambda i, j: (0, 0)),     # b2
        ],
        out_specs=pl.BlockSpec((TM, D), lambda i, j: (i, 0)),
        scratch_shapes=[pltpu.VMEM((TM, D), jnp.float32)],
        compiler_params=pltpu.CompilerParams(
            dimension_semantics=("parallel", "arbitrary"),
            vmem_limit_bytes=64 * 1024 * 1024,
        ),
        cost_estimate=cost,
    )(x2, w1b, b1, w2b, b2)

    return out.reshape(orig_shape)


# ---------------------------------------------------------------------------
# Pure-JAX reference (same numerical recipe: bf16 operands, f32 accumulation)
# ---------------------------------------------------------------------------
def feedforward_reference(x, w1, b1, w2, b2):
    h = jnp.dot(x.astype(jnp.bfloat16), w1.astype(jnp.bfloat16),
                preferred_element_type=jnp.float32) + b1
    h = jnp.maximum(h, 0.0)
    out = jnp.dot(h.astype(jnp.bfloat16), w2.astype(jnp.bfloat16),
                  preferred_element_type=jnp.float32) + b2
    return out.astype(x.dtype)


# ---------------------------------------------------------------------------
# Demo / self-check
# ---------------------------------------------------------------------------
if __name__ == "__main__":
    # Small, lane-friendly shapes consistent with the module (d_model, d_ff).
    B, S, D, D_FF = 2, 64, 128, 512

    key = jax.random.PRNGKey(0)
    kx, k1, k2, k3, k4 = jax.random.split(key, 5)
    x = jax.random.normal(kx, (B, S, D), jnp.float32)
    # nn.Linear weights stored pre-transposed as (in, out); bias as (1, out).
    w1 = 0.05 * jax.random.normal(k1, (D, D_FF), jnp.float32)
    b1 = 0.05 * jax.random.normal(k2, (1, D_FF), jnp.float32)
    w2 = 0.05 * jax.random.normal(k3, (D_FF, D), jnp.float32)
    b2 = 0.05 * jax.random.normal(k4, (1, D), jnp.float32)

    out = feedforward_pallas(x, w1, b1, w2, b2, tm=64, tf=256)
    out = jax.block_until_ready(out)

    ref = feedforward_reference(x, w1, b1, w2, b2)
    if not jnp.allclose(out, ref, atol=2e-3, rtol=2e-3):
        raise AssertionError("Pallas FeedForward output does not match JAX reference")

    print("KERNEL_OK")
</pallas_src>

<mosaic_0001>
module attributes {stable_mosaic.version = 11 : i64} {
  func.func @ffn_kernel(%arg0: i32, %arg1: i32, %arg2: memref<64x128xf32, #tpu.memory_space<vmem>>, %arg3: memref<128x256xbf16, #tpu.memory_space<vmem>>, %arg4: memref<1x256xf32, #tpu.memory_space<vmem>>, %arg5: memref<256x128xbf16, #tpu.memory_space<vmem>>, %arg6: memref<1x128xf32, #tpu.memory_space<vmem>>, %arg7: memref<64x128xf32, #tpu.memory_space<vmem>>, %arg8: memref<64x128xf32, #tpu.memory_space<vmem>>) attributes {dimension_semantics = [#tpu.dimension_semantics<parallel>, #tpu.dimension_semantics<arbitrary>], iteration_bounds = array<i64: 2, 2>, scalar_prefetch = 0 : i64, scratch_operands = 1 : i64, tpu.core_type = #tpu.core_type<tc>, window_params = [{transform_indices = @transform_0, window_bounds = array<i64: 64, 128>}, {transform_indices = @transform_1, window_bounds = array<i64: 128, 256>}, {transform_indices = @transform_2, window_bounds = array<i64: 1, 256>}, {transform_indices = @transform_3, window_bounds = array<i64: 256, 128>}, {pipeline_mode = #tpu.pipeline_mode<synchronous>, transform_indices = @transform_4, window_bounds = array<i64: 1, 128>}, {transform_indices = @transform_5, window_bounds = array<i64: 64, 128>}]} {
    %c0_i32 = arith.constant 0 : i32
    %0 = arith.cmpi eq, %arg1, %c0_i32 : i32
    %1 = arith.extui %0 : i1 to i32
    %c0_i32_0 = arith.constant 0 : i32
    %2 = arith.cmpi ne, %1, %c0_i32_0 : i32
    scf.if %2 {
      %cst_15 = arith.constant 0.000000e+00 : f32
      %21 = vector.broadcast %cst_15 : f32 to vector<64x128xf32>
      %c0_16 = arith.constant 0 : index
      %c0_17 = arith.constant 0 : index
      %22 = vector.load %arg8[%c0_16, %c0_17] : memref<64x128xf32, #tpu.memory_space<vmem>>, vector<64x128xf32>
      tpu.vector_store %arg8[%c0_16, %c0_17], %21 {strides = array<i32>} : memref<64x128xf32, #tpu.memory_space<vmem>>, vector<64x128xf32>,
    } else {
    }
    %c0 = arith.constant 0 : index
    %c0_1 = arith.constant 0 : index
    %3 = vector.load %arg2[%c0, %c0_1] : memref<64x128xf32, #tpu.memory_space<vmem>>, vector<64x128xf32>
    %4 = arith.truncf %3 : vector<64x128xf32> to vector<64x128xbf16>
    %c0_2 = arith.constant 0 : index
    %c0_3 = arith.constant 0 : index
    %5 = vector.load %arg3[%c0_2, %c0_3] : memref<128x256xbf16, #tpu.memory_space<vmem>>, vector<128x256xbf16>
    %cst = arith.constant dense<0.000000e+00> : vector<64x256xf32>
    %6 = tpu.matmul %4, %5, %cst {dimension_numbers = #tpu.dot_dimension_numbers<[1], [0], [0], [1], [0, 0, 1, 1], [], []>} : vector<64x128xbf16>, vector<128x256xbf16>, vector<64x256xf32> -> vector<64x256xf32>
    %c0_4 = arith.constant 0 : index
    %c0_5 = arith.constant 0 : index
    %7 = vector.load %arg4[%c0_4, %c0_5] : memref<1x256xf32, #tpu.memory_space<vmem>>, vector<1x256xf32>
    %8 = vector.broadcast %7 : vector<1x256xf32> to vector<64x256xf32>
    %9 = arith.addf %6, %8 : vector<64x256xf32>
    %cst_6 = arith.constant 0.000000e+00 : f32
    %10 = vector.broadcast %cst_6 : f32 to vector<64x256xf32>
    %11 = arith.maximumf %9, %10 : vector<64x256xf32>
    %c0_7 = arith.constant 0 : index
    %c0_8 = arith.constant 0 : index
    %12 = vector.load %arg8[%c0_7, %c0_8] : memref<64x128xf32, #tpu.memory_space<vmem>>, vector<64x128xf32>
    %13 = arith.truncf %11 : vector<64x256xf32> to vector<64x256xbf16>
    %c0_9 = arith.constant 0 : index
    %c0_10 = arith.constant 0 : index
    %14 = vector.load %arg5[%c0_9, %c0_10] : memref<256x128xbf16, #tpu.memory_space<vmem>>, vector<256x128xbf16>
    %cst_11 = arith.constant dense<0.000000e+00> : vector<64x128xf32>
    %15 = tpu.matmul %13, %14, %cst_11 {dimension_numbers = #tpu.dot_dimension_numbers<[1], [0], [0], [1], [0, 0, 1, 1], [], []>} : vector<64x256xbf16>, vector<256x128xbf16>, vector<64x128xf32> -> vector<64x128xf32>
    %16 = arith.addf %12, %15 : vector<64x128xf32>
    %c0_12 = arith.constant 0 : index
    %c0_13 = arith.constant 0 : index
    %17 = vector.load %arg8[%c0_12, %c0_13] : memref<64x128xf32, #tpu.memory_space<vmem>>, vector<64x128xf32>
    tpu.vector_store %arg8[%c0_12, %c0_13], %16 {strides = array<i32>} : memref<64x128xf32, #tpu.memory_space<vmem>>, vector<64x128xf32>,
    %c1_i32 = arith.constant 1 : i32
    %18 = arith.cmpi eq, %arg1, %c1_i32 : i32
    %19 = arith.extui %18 : i1 to i32
    %c0_i32_14 = arith.constant 0 : i32
    %20 = arith.cmpi ne, %19, %c0_i32_14 : i32
    scf.if %20 {
      %c0_15 = arith.constant 0 : index
      %c0_16 = arith.constant 0 : index
      %21 = vector.load %arg8[%c0_15, %c0_16] : memref<64x128xf32, #tpu.memory_space<vmem>>, vector<64x128xf32>
      %c0_17 = arith.constant 0 : index
      %c0_18 = arith.constant 0 : index
      %22 = vector.load %arg6[%c0_17, %c0_18] : memref<1x128xf32, #tpu.memory_space<vmem>>, vector<1x128xf32>
      %23 = vector.broadcast %22 : vector<1x128xf32> to vector<64x128xf32>
      %24 = arith.addf %21, %23 : vector<64x128xf32>
      %c0_19 = arith.constant 0 : index
      %c0_20 = arith.constant 0 : index
      %25 = vector.load %arg7[%c0_19, %c0_20] : memref<64x128xf32, #tpu.memory_space<vmem>>, vector<64x128xf32>
      tpu.vector_store %arg7[%c0_19, %c0_20], %24 {strides = array<i32>} : memref<64x128xf32, #tpu.memory_space<vmem>>, vector<64x128xf32>,
    } else {
    }
    return
  }
  func.func @transform_0(%arg0: i32, %arg1: i32) -> (i32, i32) {
    %c0_i32 = arith.constant 0 : i32
    %c0_i32_0 = arith.constant 0 : i32
    return %arg0, %c0_i32 : i32, i32
  }
  func.func @transform_1(%arg0: i32, %arg1: i32) -> (i32, i32) {
    %c0_i32 = arith.constant 0 : i32
    %c0_i32_0 = arith.constant 0 : i32
    return %c0_i32, %arg1 : i32, i32
  }
  func.func @transform_2(%arg0: i32, %arg1: i32) -> (i32, i32) {
    %c0_i32 = arith.constant 0 : i32
    %c0_i32_0 = arith.constant 0 : i32
    return %c0_i32, %arg1 : i32, i32
  }
  func.func @transform_3(%arg0: i32, %arg1: i32) -> (i32, i32) {
    %c0_i32 = arith.constant 0 : i32
    %c0_i32_0 = arith.constant 0 : i32
    return %arg1, %c0_i32 : i32, i32
  }
  func.func @transform_4(%arg0: i32, %arg1: i32) -> (i32, i32) {
    %c0_i32 = arith.constant 0 : i32
    %c0_i32_0 = arith.constant 0 : i32
    %c0_i32_1 = arith.constant 0 : i32
    return %c0_i32, %c0_i32_0 : i32, i32
  }
  func.func @transform_5(%arg0: i32, %arg1: i32) -> (i32, i32) {
    %c0_i32 = arith.constant 0 : i32
    %c0_i32_0 = arith.constant 0 : i32
    return %arg0, %c0_i32 : i32, i32
  }
}

</mosaic_0001>

<llo_original>
// kernel: tpu_custom_call.1
$region0: #{tpu_custom_call.1}
  #allocation0 [shape = 'u32[]', space=smem, size = 0x4, offset = 0x4, fixed_abs, tag = 'smem constant byte address 0x4 - core index']
  #allocation1 [shape = 'u32[144,128]{1,0:T(1,128)}', space=vmem, size = 0x12000, scoped, tag = 'internal scratch']
  #allocation2 [shape = 'f32[64,128]{1,0:T(8,128)}', space=vmem, size = 0x8000, scoped, tag = 'scratch operand']
  %s0 = inlined_call_operand.hbm [shape: f32[128,128], index: 0, kind: input, shape index: {}]
  %s1 = inlined_call_operand.hbm [shape: bf16[128,512], index: 1, kind: input, shape index: {}]
  %s2 = inlined_call_operand.hbm [shape: f32[1,512], index: 2, kind: input, shape index: {}]
  %s3 = inlined_call_operand.hbm [shape: bf16[512,128], index: 3, kind: input, shape index: {}]
  %s4 = inlined_call_operand.hbm [shape: f32[1,128], index: 4, kind: input, shape index: {}]
  %s5 = inlined_call_operand.hbm [shape: f32[128,128], index: 5, kind: output, shape index: {}]
  %s6 = sld [smem:[#allocation0]]
  $region81: #{tpu_custom_call.1} parent=0
    _
  %s8 = ssub.s32 1, %s6
  %s9 = scalar_select 0, %s8, %s6
  $region1: #{tpu_custom_call.1} parent=0
    #allocation3 [shape = 'u8[65536]{0}', space=vmem, size = 0x10000, scoped, tag = 'input window, operand 0']
    #allocation4 [shape = 's32[2]{0}', space=sflag, size = 0x8, scoped, tag = 'scoped memory for tpu_custom_call.1']
    #allocation5 [shape = 's32[2]{0}', space=sflag, size = 0x8, scoped, tag = 'scoped memory for tpu_custom_call.1']
    #allocation6 [shape = 'u8[131072]{0}', space=vmem, size = 0x20000, scoped, tag = 'input window, operand 1']
    #allocation7 [shape = 's32[2]{0}', space=sflag, size = 0x8, scoped, tag = 'scoped memory for tpu_custom_call.1']
    #allocation8 [shape = 'u8[2048]{0}', space=vmem, size = 0x800, scoped, tag = 'input window, operand 2']
    #allocation9 [shape = 'u8[131072]{0}', space=vmem, size = 0x20000, scoped, tag = 'input window, operand 3']
    #allocation10 [shape = 's32[2]{0}', space=sflag, size = 0x8, scoped, tag = 'scoped memory for tpu_custom_call.1']
    #allocation11 [shape = 'u8[512]{0}', space=vmem, size = 0x400, scoped, tag = 'input window, operand 4, single buffered']
    #allocation12 [shape = 'u8[65536]{0}', space=vmem, size = 0x10000, scoped, tag = 'output window, operand 0']
    %10 = vsyncpa [#allocation4], 0
    %s11 = scalar_lea.sflag [#allocation4], 1
    %12 = vsyncpa %s11, 0
    %13 = vsyncpa [#allocation7], 0
    %s14 = scalar_lea.sflag [#allocation7], 1
    %15 = vsyncpa %s14, 0
    %16 = vsyncpa [#allocation10], 0
    %s17 = scalar_lea.sflag [#allocation10], 1
    %18 = vsyncpa %s17, 0
    %19 = vsyncpa [#allocation5], 0
    %s20 = scalar_lea.sflag [#allocation5], 1
    %21 = vsyncpa %s20, 0
    loop: start=0, step=1, limit=6
    $region2: #{tpu_custom_call.1} parent=1 // loop_pre_header
      _
    $region3: #{tpu_custom_call.1} parent=1 // loop_header
      %s23 = sphi 0, %s27
      %p24 = scmp.ge.s32.totalorder %s23, 6
      %s30 = sphi 0, %s42
      %s31 = sphi 0, %s38
      %s32 = sphi 0, %s30
      %s33 = sphi 0, %s31
      %s34 = sphi 0, %s32
      %s35 = sphi 0, %s33
      %s45 = sphi 0, %s47
      %s48 = sphi 0, %s45
      %s49 = sphi 0, %s48
      %s65 = sphi 0, %s49
      %s71 = sphi 0, %s73
      %s74 = sphi 0, %s71
      %s75 = sphi 0, %s74
      %s91 = sphi 0, %s75
      %s97 = sphi 0, %s99
      %s100 = sphi 0, %s97
      %s101 = sphi 0, %s100
      %s117 = sphi 0, %s101
      %s123 = sphi 0, %s125
      %s126 = sphi 0, %s123
      %s127 = sphi 0, %s126
      %s143 = sphi 0, %s127
      %s147 = sphi 0, %s147
      %s149 = sphi 0, %s147
      %s150 = sphi 0, %s149
      %s164 = sphi 0, %s150
      %s170 = sphi 0, %s172
      %s173 = sphi 0, %s170
      %s174 = sphi 0, %s173
      %s190 = sphi 0, %s174
    $region4: #{tpu_custom_call.1} parent=1 // loop_header_branch
      %26 = sbr.rel (%p24) target = $region8
    $region5: #{tpu_custom_call.1} parent=1 // loop_body
      %s28 = ssub.s32 %s23, 1
      %s29 = ssub.s32 %s23, 2
      %s36 = sadd.s32 1, %s31
      %p37 = scmp.ge.s32.totalorder %s36, 2
      %s38 = scalar_select %p37, 0, %s36
      %s39 = sadd.s32 1, %s30
      %s40 = scalar_select %p37, %s39, %s30
      %p41 = scmp.ge.s32.totalorder %s40, 2
      %s42 = scalar_select %p41, 0, %s40
      %s43 = ssub.s32 %s30, %s42
      %p44 = scmp.eq.s32.totalorder %s43, 0
      %s46 = sadd.s32 %s45, 1
      %s47 = scalar_select %p44, %s45, %s46
      %p50 = pneg %p44
      %p51 = scmp.eq.s32.totalorder %s23, 3
      %p52 = por %p50, %p51
      %p53 = scmp.ne.s32.totalorder %s45, %s48
      %p54 = scmp.eq.s32.totalorder %s23, 0
      %p55 = por %p53, %p54
      %p56 = scmp.ne.s32.totalorder %s45, %s48
      %p57 = scmp.eq.s32.totalorder %s28, 3
      %p58 = por %p56, %p57
      %p59 = scmp.ne.s32.totalorder %s48, %s49
      %p60 = scmp.eq.s32.totalorder %s28, 0
      %p61 = por %p59, %p60
      %p62 = scmp.ne.s32.totalorder %s48, %s49
      %p63 = scmp.eq.s32.totalorder %s29, 3
      %p64 = por %p62, %p63
      %p66 = scmp.ne.s32.totalorder %s49, %s65
      %p67 = scmp.eq.s32.totalorder %s29, 0
      %p68 = por %p66, %p67
      %s69 = ssub.s32 %s31, %s38
      %p70 = scmp.eq.s32.totalorder %s69, 0
      %s72 = sadd.s32 %s71, 1
      %s73 = scalar_select %p70, %s71, %s72
      %p76 = pneg %p70
      %p77 = scmp.eq.s32.totalorder %s23, 3
      %p78 = por %p76, %p77
      %p79 = scmp.ne.s32.totalorder %s71, %s74
      %p80 = scmp.eq.s32.totalorder %s23, 0
      %p81 = por %p79, %p80
      %p82 = scmp.ne.s32.totalorder %s71, %s74
      %p83 = scmp.eq.s32.totalorder %s28, 3
      %p84 = por %p82, %p83
      %p85 = scmp.ne.s32.totalorder %s74, %s75
      %p86 = scmp.eq.s32.totalorder %s28, 0
      %p87 = por %p85, %p86
      %p88 = scmp.ne.s32.totalorder %s74, %s75
      %p89 = scmp.eq.s32.totalorder %s29, 3
      %p90 = por %p88, %p89
      %p92 = scmp.ne.s32.totalorder %s75, %s91
      %p93 = scmp.eq.s32.totalorder %s29, 0
      %p94 = por %p92, %p93
      %s95 = ssub.s32 %s31, %s38
      %p96 = scmp.eq.s32.totalorder %s95, 0
      %s98 = sadd.s32 %s97, 1
      %s99 = scalar_select %p96, %s97, %s98
      %p102 = pneg %p96
      %p103 = scmp.eq.s32.totalorder %s23, 3
      %p104 = por %p102, %p103
      %p105 = scmp.ne.s32.totalorder %s97, %s100
      %p106 = scmp.eq.s32.totalorder %s23, 0
      %p107 = por %p105, %p106
      %p108 = scmp.ne.s32.totalorder %s97, %s100
      %p109 = scmp.eq.s32.totalorder %s28, 3
      %p110 = por %p108, %p109
      %p111 = scmp.ne.s32.totalorder %s100, %s101
      %p112 = scmp.eq.s32.totalorder %s28, 0
      %p113 = por %p111, %p112
      %p114 = scmp.ne.s32.totalorder %s100, %s101
      %p115 = scmp.eq.s32.totalorder %s29, 3
      %p116 = por %p114, %p115
      %p118 = scmp.ne.s32.totalorder %s101, %s117
      %p119 = scmp.eq.s32.totalorder %s29, 0
      %p120 = por %p118, %p119
      %s121 = ssub.s32 %s31, %s38
      %p122 = scmp.eq.s32.totalorder %s121, 0
      %s124 = sadd.s32 %s123, 1
      %s125 = scalar_select %p122, %s123, %s124
      %p128 = pneg %p122
      %p129 = scmp.eq.s32.totalorder %s23, 3
      %p130 = por %p128, %p129
      %p131 = scmp.ne.s32.totalorder %s123, %s126
      %p132 = scmp.eq.s32.totalorder %s23, 0
      %p133 = por %p131, %p132
      %p134 = scmp.ne.s32.totalorder %s123, %s126
      %p135 = scmp.eq.s32.totalorder %s28, 3
      %p136 = por %p134, %p135
      %p137 = scmp.ne.s32.totalorder %s126, %s127
      %p138 = scmp.eq.s32.totalorder %s28, 0
      %p139 = por %p137, %p138
      %p140 = scmp.ne.s32.totalorder %s126, %s127
      %p141 = scmp.eq.s32.totalorder %s29, 3
      %p142 = por %p140, %p141
      %p144 = scmp.ne.s32.totalorder %s127, %s143
      %p145 = scmp.eq.s32.totalorder %s29, 0
      %p146 = por %p144, %p145
      %s148 = sadd.s32 %s147, 1
      %p151 = scmp.eq.s32.totalorder %s23, 3
      %p152 = scmp.ne.s32.totalorder %s147, %s149
      %p153 = scmp.eq.s32.totalorder %s23, 0
      %p154 = por %p152, %p153
      %p155 = scmp.ne.s32.totalorder %s147, %s149
      %p156 = scmp.eq.s32.totalorder %s28, 3
      %p157 = por %p155, %p156
      %p158 = scmp.ne.s32.totalorder %s149, %s150
      %p159 = scmp.eq.s32.totalorder %s28, 0
      %p160 = por %p158, %p159
      %p161 = scmp.ne.s32.totalorder %s149, %s150
      %p162 = scmp.eq.s32.totalorder %s29, 3
      %p163 = por %p161, %p162
      %p165 = scmp.ne.s32.totalorder %s150, %s164
      %p166 = scmp.eq.s32.totalorder %s29, 0
      %p167 = por %p165, %p166
      %s168 = ssub.s32 %s30, %s42
      %p169 = scmp.eq.s32.totalorder %s168, 0
      %s171 = sadd.s32 %s170, 1
      %s172 = scalar_select %p169, %s170, %s171
      %p175 = pneg %p169
      %p176 = scmp.eq.s32.totalorder %s23, 3
      %p177 = por %p175, %p176
      %p178 = scmp.ne.s32.totalorder %s170, %s173
      %p179 = scmp.eq.s32.totalorder %s23, 0
      %p180 = por %p178, %p179
      %p181 = scmp.ne.s32.totalorder %s170, %s173
      %p182 = scmp.eq.s32.totalorder %s28, 3
      %p183 = por %p181, %p182
      %p184 = scmp.ne.s32.totalorder %s173, %s174
      %p185 = scmp.eq.s32.totalorder %s28, 0
      %p186 = por %p184, %p185
      %p187 = scmp.ne.s32.totalorder %s173, %s174
      %p188 = scmp.eq.s32.totalorder %s29, 3
      %p189 = por %p187, %p188
      %p191 = scmp.ne.s32.totalorder %s174, %s190
      %p192 = scmp.eq.s32.totalorder %s29, 0
      %p193 = por %p191, %p192
      %p194 = scmp.le.s32.totalorder 1, %s23
      %p195 = scmp.lt.s32.totalorder %s23, 5
      %p196 = pnand %p194, %p195
      %p197 = pneg %p196
      // Predicated region
      $region9: #{tpu_custom_call.1} parent=5 // pred_check
        _
      $region10: #{tpu_custom_call.1} parent=5 // pred_check_branch
        %199 = sbr.rel (%p196) target = $region12
      $region11: #{tpu_custom_call.1} parent=5 // pred_region
        %s200 = ssub.s32 %s23, 1
        // Predicated region
        $region13: #{tpu_custom_call.1} parent=11 // pred_check
          %p201 = pneg %p160
        $region14: #{tpu_custom_call.1} parent=11 // pred_check_branch
          %203 = sbr.rel (%p201) target = $region16
        $region15: #{tpu_custom_call.1} parent=11 // pred_region
          %s205 = ssub.s32 16, 16
          %206 = vsyncadd [#allocation10], %s205
          %s208 = sshll.u32 [#allocation11], 4
          %s209 = int_to_ptr.vmem [resolvable:$true] %s208
          %211 = dma.hbm_to_vmem [thread:$0]  %s4, 16, %s209, [#allocation10]
        $region16: #{tpu_custom_call.1} parent=11 // pred_fallthru
          _
      $region12: #{tpu_custom_call.1} parent=5 // pred_fallthru
        _
      %p212 = scmp.lt.s32.totalorder %s23, 4
      // Predicated region
      $region17: #{tpu_custom_call.1} parent=5 // pred_check
        %p213 = pneg %p212
      $region18: #{tpu_custom_call.1} parent=5 // pred_check_branch
        %215 = sbr.rel (%p213) target = $region20
      $region19: #{tpu_custom_call.1} parent=5 // pred_region
        // Predicated region
        $region21: #{tpu_custom_call.1} parent=19 // pred_check
          %p216 = pneg %p55
        $region22: #{tpu_custom_call.1} parent=19 // pred_check_branch
          %218 = sbr.rel (%p216) target = $region24
        $region23: #{tpu_custom_call.1} parent=19 // pred_region
          %s219 = sand.u32 %s45, 1
          %s220 = scalar_lea.sflag [#allocation4], %s219
          %s221 = sand.u32 %s45, 1
          %s222 = smul.addr %s221, 64
          %s223 = scalar_lea.vmem [#allocation3], %s222
          %s224 = smul.u32 8, %s30
          %s226 = ssub.s32 1024, 1024
          %227 = vsyncadd %s220, %s226
          %s228 = smul.addr %s224, 128
          %s229 = scalar_lea.hbm %s0, %s228
          %s230 = sshll.u32 %s223, 4
          %s231 = int_to_ptr.vmem [resolvable:$true] %s230
          %236 = dma.hbm_to_vmem [thread:$0]  %s229, 1024, %s231, %s220, 128, 128, 8
        $region24: #{tpu_custom_call.1} parent=19 // pred_fallthru
          _
        // Predicated region
        $region25: #{tpu_custom_call.1} parent=19 // pred_check
          %p237 = pneg %p81
        $region26: #{tpu_custom_call.1} parent=19 // pred_check_branch
          %239 = sbr.rel (%p237) target = $region28
        $region27: #{tpu_custom_call.1} parent=19 // pred_region
          %s240 = sand.u32 %s23, 1
          %s241 = scalar_lea.sflag [#allocation7], %s240
          %s242 = sand.u32 %s71, 1
          %s243 = smul.addr %s242, 128
          %s244 = scalar_lea.vmem [#allocation6], %s243
          %s245 = smul.u32 2, %s31
          %s247 = ssub.s32 2048, 2048
          %248 = vsyncadd %s241, %s247
          %s249 = smul.addr %s245, 64
          %s250 = scalar_lea.hbm %s1, %s249
          %s251 = sshll.u32 %s244, 4
          %s252 = int_to_ptr.vmem [resolvable:$true] %s251
          %257 = dma.hbm_to_vmem [thread:$0]  %s250, 2048, %s252, %s241, 256, 128, 8
        $region28: #{tpu_custom_call.1} parent=19 // pred_fallthru
          _
        // Predicated region
        $region29: #{tpu_custom_call.1} parent=19 // pred_check
          %p258 = pneg %p107
        $region30: #{tpu_custom_call.1} parent=19 // pred_check_branch
          %260 = sbr.rel (%p258) target = $region32
        $region31: #{tpu_custom_call.1} parent=19 // pred_region
          %s261 = sand.u32 %s23, 1
          %s262 = scalar_lea.sflag [#allocation7], %s261
          %s263 = sand.u32 %s97, 1
          %s264 = smul.addr %s263, 2
          %s265 = scalar_lea.vmem [#allocation8], %s264
          %s266 = smul.u32 2, %s31
          %s268 = ssub.s32 32, 32
          %269 = vsyncadd %s262, %s268
          %s270 = smul.addr %s266, 16
          %s271 = scalar_lea.hbm %s2, %s270
          %s273 = sshll.u32 %s265, 4
          %s274 = int_to_ptr.vmem [resolvable:$true] %s273
          %276 = dma.hbm_to_vmem [thread:$0]  %s271, 32, %s274, %s262
        $region32: #{tpu_custom_call.1} parent=19 // pred_fallthru
          _
        // Predicated region
        $region33: #{tpu_custom_call.1} parent=19 // pred_check
          %p277 = pneg %p133
        $region34: #{tpu_custom_call.1} parent=19 // pred_check_branch
          %279 = sbr.rel (%p277) target = $region36
        $region35: #{tpu_custom_call.1} parent=19 // pred_region
          %s280 = sand.u32 %s23, 1
          %s281 = scalar_lea.sflag [#allocation10], %s280
          %s282 = sand.u32 %s123, 1
          %s283 = smul.addr %s282, 128
          %s284 = scalar_lea.vmem [#allocation9], %s283
          %s285 = smul.u32 32, %s31
          %s287 = ssub.s32 2048, 2048
          %288 = vsyncadd %s281, %s287
          %s289 = smul.addr %s285, 64
          %s290 = scalar_lea.hbm %s3, %s289
          %s291 = sshll.u32 %s284, 4
          %s292 = int_to_ptr.vmem [resolvable:$true] %s291
          %297 = dma.hbm_to_vmem [thread:$0]  %s290, 2048, %s292, %s281, 64, 64, 4
        $region36: #{tpu_custom_call.1} parent=19 // pred_fallthru
          _
      $region20: #{tpu_custom_call.1} parent=5 // pred_fallthru
        _
      %p298 = scmp.le.s32.totalorder 1, %s23
      %p299 = scmp.lt.s32.totalorder %s23, 5
      %p300 = pnand %p298, %p299
      %p301 = pneg %p300
      // Predicated region
      $region37: #{tpu_custom_call.1} parent=5 // pred_check
        _
      $region38: #{tpu_custom_call.1} parent=5 // pred_check_branch
        %303 = sbr.rel (%p300) target = $region40
      $region39: #{tpu_custom_call.1} parent=5 // pred_region
        %s304 = ssub.s32 %s23, 1
        %s305 = sand.u32 %s48, 1
        %s306 = scalar_lea.sflag [#allocation4], %s305
        %s307 = sand.u32 %s48, 1
        %s308 = smul.addr %s307, 64
        %s309 = scalar_lea.vmem [#allocation3], %s308
        // Predicated region
        $region41: #{tpu_custom_call.1} parent=39 // pred_check
          %p310 = pneg %p61
        $region42: #{tpu_custom_call.1} parent=39 // pred_check_branch
          %312 = sbr.rel (%p310) target = $region44
        $region43: #{tpu_custom_call.1} parent=39 // pred_region
          %313 = dma.done %s306, 1024
        $region44: #{tpu_custom_call.1} parent=39 // pred_fallthru
          _
        %s314 = sand.u32 %s28, 1
        %s315 = scalar_lea.sflag [#allocation7], %s314
        %s316 = sand.u32 %s74, 1
        %s317 = smul.addr %s316, 128
        %s318 = scalar_lea.vmem [#allocation6], %s317
        // Predicated region
        $region45: #{tpu_custom_call.1} parent=39 // pred_check
          %p319 = pneg %p87
        $region46: #{tpu_custom_call.1} parent=39 // pred_check_branch
          %321 = sbr.rel (%p319) target = $region48
        $region47: #{tpu_custom_call.1} parent=39 // pred_region
          %322 = dma.done %s315, 2048
        $region48: #{tpu_custom_call.1} parent=39 // pred_fallthru
          _
        %s323 = sand.u32 %s28, 1
        %s324 = scalar_lea.sflag [#allocation7], %s323
        %s325 = sand.u32 %s100, 1
        %s326 = smul.addr %s325, 2
        %s327 = scalar_lea.vmem [#allocation8], %s326
        // Predicated region
        $region49: #{tpu_custom_call.1} parent=39 // pred_check
          %p328 = pneg %p113
        $region50: #{tpu_custom_call.1} parent=39 // pred_check_branch
          %330 = sbr.rel (%p328) target = $region52
        $region51: #{tpu_custom_call.1} parent=39 // pred_region
          %331 = dma.done %s324, 32
        $region52: #{tpu_custom_call.1} parent=39 // pred_fallthru
          _
        %s332 = sand.u32 %s28, 1
        %s333 = scalar_lea.sflag [#allocation10], %s332
        %s334 = sand.u32 %s126, 1
        %s335 = smul.addr %s334, 128
        %s336 = scalar_lea.vmem [#allocation9], %s335
        // Predicated region
        $region53: #{tpu_custom_call.1} parent=39 // pred_check
          %p337 = pneg %p139
        $region54: #{tpu_custom_call.1} parent=39 // pred_check_branch
          %339 = sbr.rel (%p337) target = $region56
        $region55: #{tpu_custom_call.1} parent=39 // pred_region
          %340 = dma.done %s333, 2048
        $region56: #{tpu_custom_call.1} parent=39 // pred_fallthru
          _
        // Predicated region
        $region57: #{tpu_custom_call.1} parent=39 // pred_check
          %p341 = pneg %p160
        $region58: #{tpu_custom_call.1} parent=39 // pred_check_branch
          %343 = sbr.rel (%p341) target = $region60
        $region59: #{tpu_custom_call.1} parent=39 // pred_region
          %344 = dma.done [#allocation10], 16
        $region60: #{tpu_custom_call.1} parent=39 // pred_fallthru
          _
        %s345 = sand.u32 %s48, 1
        %s346 = scalar_lea.sflag [#allocation4], %s345
        %s347 = sand.u32 %s48, 1
        %s348 = smul.addr %s347, 64
        %s349 = scalar_lea.vmem [#allocation3], %s348
        %p350 = pneg %p61
        %p351 = pneg %p58
        %s352 = sand.u32 %s28, 1
        %s353 = scalar_lea.sflag [#allocation7], %s352
        %s354 = sand.u32 %s74, 1
        %s355 = smul.addr %s354, 128
        %s356 = scalar_lea.vmem [#allocation6], %s355
        %p357 = pneg %p87
        %p358 = pneg %p84
        %s359 = sand.u32 %s28, 1
        %s360 = scalar_lea.sflag [#allocation7], %s359
        %s361 = sand.u32 %s100, 1
        %s362 = smul.addr %s361, 2
        %s363 = scalar_lea.vmem [#allocation8], %s362
        %p364 = pneg %p113
        %p365 = pneg %p110
        %s366 = sand.u32 %s28, 1
        %s367 = scalar_lea.sflag [#allocation10], %s366
        %s368 = sand.u32 %s126, 1
        %s369 = smul.addr %s368, 128
        %s370 = scalar_lea.vmem [#allocation9], %s369
        %p371 = pneg %p139
        %p372 = pneg %p136
        %p373 = pneg %p160
        %p374 = pneg %p157
        %p375 = pneg %p186
        %p376 = pneg %p183
        %s377 = sand.u32 %s173, 1
        %s378 = scalar_lea.sflag [#allocation5], %s377
        %s379 = sand.u32 %s173, 1
        %s380 = smul.addr %s379, 64
        %s381 = scalar_lea.vmem [#allocation12], %s380
        %s382 = smul.u32 8, %s32
        %s383 = smul.u32 2, %s33
        %s384 = smul.u32 2, %s33
        %s385 = smul.u32 32, %s33
        %s386 = smul.u32 8, %s32
        %p388 = scmp.eq.s32.totalorder %s33, 0
        // Predicated region
        $region61: #{tpu_custom_call.1} parent=39 // pred_check
          %p389 = pneg %p388
        $region62: #{tpu_custom_call.1} parent=39 // pred_check_branch
          %391 = sbr.rel (%p389) target = $region64
        $region63: #{tpu_custom_call.1} parent=39 // pred_region
          %392 = vst [vmem:[#allocation2] sm:$0xff] 0.0
          %393 = vst [vmem:[#allocation2 + $0x8] sm:$0xff] 0.0
          %394 = vst [vmem:[#allocation2 + $0x10] sm:$0xff] 0.0
          %395 = vst [vmem:[#allocation2 + $0x18] sm:$0xff] 0.0
          %396 = vst [vmem:[#allocation2 + $0x20] sm:$0xff] 0.0
          %397 = vst [vmem:[#allocation2 + $0x28] sm:$0xff] 0.0
          %398 = vst [vmem:[#allocation2 + $0x30] sm:$0xff] 0.0
          %399 = vst [vmem:[#allocation2 + $0x38] sm:$0xff] 0.0
        $region64: #{tpu_custom_call.1} parent=39 // pred_fallthru
          _
        %v400 = vld [vmem:[%s309] sm:$0xff]
        %v401 = vld [vmem:[%s309 + $0x8] sm:$0xff]
        %v402 = vld [vmem:[%s309 + $0x10] sm:$0xff]
        %v403 = vld [vmem:[%s309 + $0x18] sm:$0xff]
        %v404 = vld [vmem:[%s309 + $0x20] sm:$0xff]
        %v405 = vld [vmem:[%s309 + $0x28] sm:$0xff]
        %v406 = vld [vmem:[%s309 + $0x30] sm:$0xff]
        %v407 = vld [vmem:[%s309 + $0x38] sm:$0xff]
        %v408 = vpack.c.bf16 %v401, %v400
        %v409 = vpack.c.bf16 %v403, %v402
        %v410 = vpack.c.bf16 %v405, %v404
        %v411 = vpack.c.bf16 %v407, %v406
        %v412 = vld [vmem:[%s318] sm:$0xff]
        %v413 = vld [vmem:[%s318 + $0x8] sm:$0xff]
        %v414 = vld [vmem:[%s318 + $0x10] sm:$0xff]
        %v415 = vld [vmem:[%s318 + $0x18] sm:$0xff]
        %v416 = vld [vmem:[%s318 + $0x20] sm:$0xff]
        %v417 = vld [vmem:[%s318 + $0x28] sm:$0xff]
        %v418 = vld [vmem:[%s318 + $0x30] sm:$0xff]
        %v419 = vld [vmem:[%s318 + $0x38] sm:$0xff]
        %v420 = vld [vmem:[%s318 + $0x40] sm:$0xff]
        %v421 = vld [vmem:[%s318 + $0x48] sm:$0xff]
        %v422 = vld [vmem:[%s318 + $0x50] sm:$0xff]
        %v423 = vld [vmem:[%s318 + $0x58] sm:$0xff]
        %v424 = vld [vmem:[%s318 + $0x60] sm:$0xff]
        %v425 = vld [vmem:[%s318 + $0x68] sm:$0xff]
        %v426 = vld [vmem:[%s318 + $0x70] sm:$0xff]
        %v427 = vld [vmem:[%s318 + $0x78] sm:$0xff]
        %v428 = vld [vmem:[%s327] sm:$0x3]
        %v430 = vlaneseq
        %v431 = vshrl.u32 %v430, 7
        %v432 = vsub.s32 0, %v431
        %v433 = vrot.slane %v428, %v432
        %v434 = vlaneseq
        %v435 = vshrl.u32 %v434, 7
        %v436 = vsub.s32 1, %v435
        %v437 = vrot.slane %v428, %v436
        %v456 = vunpack.c.l.b16 %v412
        %v457 = vunpack.c.h.b16 %v412
        %v458 = vunpack.c.l.b16 %v413
        %v459 = vunpack.c.h.b16 %v413
        %v460 = vunpack.c.l.b16 %v414
        %v461 = vunpack.c.h.b16 %v414
        %v462 = vunpack.c.l.b16 %v415
        %v463 = vunpack.c.h.b16 %v415
        %v464 = vunpack.c.l.b16 %v416
        %v465 = vunpack.c.h.b16 %v416
        %v466 = vunpack.c.l.b16 %v417
        %v467 = vunpack.c.h.b16 %v417
        %v468 = vunpack.c.l.b16 %v418
        %v469 = vunpack.c.h.b16 %v418
        %v470 = vunpack.c.l.b16 %v419
        %v471 = vunpack.c.h.b16 %v419
        %v472 = vunpack.c.l.b16 %v420
        %v473 = vunpack.c.h.b16 %v420
        %v474 = vunpack.c.l.b16 %v421
        %v475 = vunpack.c.h.b16 %v421
        %v476 = vunpack.c.l.b16 %v422
        %v477 = vunpack.c.h.b16 %v422
        %v478 = vunpack.c.l.b16 %v423
        %v479 = vunpack.c.h.b16 %v423
        %v480 = vunpack.c.l.b16 %v424
        %v481 = vunpack.c.h.b16 %v424
        %v482 = vunpack.c.l.b16 %v425
        %v483 = vunpack.c.h.b16 %v425
        %v484 = vunpack.c.l.b16 %v426
        %v485 = vunpack.c.h.b16 %v426
        %v486 = vunpack.c.l.b16 %v427
        %v487 = vunpack.c.h.b16 %v427
        %v488 = vpack.c.b16 %v458, %v456
        %v489 = vpack.c.b16 %v459, %v457
        %v490 = vpack.c.b16 %v462, %v460
        %v491 = vpack.c.b16 %v463, %v461
        %v492 = vpack.c.b16 %v466, %v464
        %v493 = vpack.c.b16 %v467, %v465
        %v494 = vpack.c.b16 %v470, %v468
        %v495 = vpack.c.b16 %v471, %v469
        %v496 = vpack.c.b16 %v474, %v472
        %v497 = vpack.c.b16 %v475, %v473
        %v498 = vpack.c.b16 %v478, %v476
        %v499 = vpack.c.b16 %v479, %v477
        %v500 = vpack.c.b16 %v482, %v480
        %v501 = vpack.c.b16 %v483, %v481
        %v502 = vpack.c.b16 %v486, %v484
        %v503 = vpack.c.b16 %v487, %v485
        %520 = vmatprep.subr.bf16.mxu0 %v489
        %521 = vmatpush1.bf16.msra.mxu0 %v488
        %522 = vmatprep.subr.bf16.mxu0 %v491
        %523 = vmatpush1.bf16.msra.mxu0 %v490
        %524 = vmatprep.subr.bf16.mxu0 %v493
        %525 = vmatpush1.bf16.msra.mxu0 %v492
        %526 = vmatprep.subr.bf16.mxu0 %v495
        %527 = vmatpush1.bf16.msra.mxu0 %v494
        %528 = vmatprep.subr.bf16.mxu0 %v497
        %529 = vmatpush1.bf16.msra.mxu0 %v496
        %530 = vmatprep.subr.bf16.mxu0 %v499
        %531 = vmatpush1.bf16.msra.mxu0 %v498
        %532 = vmatprep.subr.bf16.mxu0 %v501
        %533 = vmatpush1.bf16.msra.mxu0 %v500
        %534 = vmatprep.subr.bf16.mxu0 %v503
        %535 = vmatpush1.bf16.msra.mxu0 %v502
        %536 = vmatprep.subr.bf16.mxu0 0
        %537 = vmatpush1.bf16.msra.mxu0 0
        %538 = vmatprep.subr.bf16.mxu0 0
        %539 = vmatpush1.bf16.msra.mxu0 0
        %540 = vmatprep.subr.bf16.mxu0 0
        %541 = vmatpush1.bf16.msra.mxu0 0
        %542 = vmatprep.subr.bf16.mxu0 0
        %543 = vmatpush1.bf16.msra.mxu0 0
        %544 = vmatprep.subr.bf16.mxu0 0
        %545 = vmatpush1.bf16.msra.mxu0 0
        %546 = vmatprep.subr.bf16.mxu0 0
        %547 = vmatpush1.bf16.msra.mxu0 0
        %548 = vmatprep.subr.bf16.mxu0 0
        %549 = vmatpush1.bf16.msra.mxu0 0
        %550 = vmatprep.subr.bf16.mxu0 0
        %551 = vmatpush1.bf16.msra.mxu0 0
        %552 = vmatprep.mubr.bf16.mxu0 0
        %553 = vmatmul.mubr.bf16.gmra.mrb[0].mxu0 %v408
        %v554 = vpop.f32.mrb[0].mxu0
        %v555 = vadd.f32 %v433, %v554
        %v556 = vpop.f32.mrb[0].mxu0
        %v557 = vadd.f32 %v437, %v556
        %v558 = vpop.f32.mrb[0].mxu0
        %v559 = vadd.f32 %v433, %v558
        %v560 = vpop.f32.mrb[0].mxu0
        %v561 = vadd.f32 %v437, %v560
        %562 = vmatprep.mubr.bf16.mxu0 0
        %563 = vmatmul.mubr.bf16.gmra.mrb[0].mxu0 %v409
        %v564 = vpop.f32.mrb[0].mxu0
        %v565 = vadd.f32 %v433, %v564
        %v566 = vpop.f32.mrb[0].mxu0
        %v567 = vadd.f32 %v437, %v566
        %v568 = vpop.f32.mrb[0].mxu0
        %v569 = vadd.f32 %v433, %v568
        %v570 = vpop.f32.mrb[0].mxu0
        %v571 = vadd.f32 %v437, %v570
        %572 = vmatprep.mubr.bf16.mxu0 0
        %573 = vmatmul.mubr.bf16.gmra.mrb[0].mxu0 %v410
        %v574 = vpop.f32.mrb[0].mxu0
        %v575 = vadd.f32 %v433, %v574
        %v576 = vpop.f32.mrb[0].mxu0
        %v577 = vadd.f32 %v437, %v576
        %v578 = vpop.f32.mrb[0].mxu0
        %v579 = vadd.f32 %v433, %v578
        %v580 = vpop.f32.mrb[0].mxu0
        %v581 = vadd.f32 %v437, %v580
        %582 = vmatprep.mubr.bf16.mxu0 0
        %583 = vmatmul.mubr.bf16.gmra.mrb[0].mxu0 %v411
        %v584 = vpop.f32.mrb[0].mxu0
        %v585 = vadd.f32 %v433, %v584
        %v586 = vpop.f32.mrb[0].mxu0
        %v587 = vadd.f32 %v437, %v586
        %v588 = vpop.f32.mrb[0].mxu0
        %v589 = vadd.f32 %v433, %v588
        %v590 = vpop.f32.mrb[0].mxu0
        %v591 = vadd.f32 %v437, %v590
        %592 = vdwg.mxu0
        %v593 = vmax.f32 %v555, 0.0
        %v594 = vmax.f32 %v557, 0.0
        %v595 = vmax.f32 %v559, 0.0
        %v596 = vmax.f32 %v561, 0.0
        %v597 = vmax.f32 %v565, 0.0
        %v598 = vmax.f32 %v567, 0.0
        %v599 = vmax.f32 %v569, 0.0
        %v600 = vmax.f32 %v571, 0.0
        %v601 = vmax.f32 %v575, 0.0
        %v602 = vmax.f32 %v577, 0.0
        %v603 = vmax.f32 %v579, 0.0
        %v604 = vmax.f32 %v581, 0.0
        %v605 = vmax.f32 %v585, 0.0
        %v606 = vmax.f32 %v587, 0.0
        %v607 = vmax.f32 %v589, 0.0
        %v608 = vmax.f32 %v591, 0.0
        %v609 = vld [vmem:[#allocation2] sm:$0xff]
        %v610 = vld [vmem:[#allocation2 + $0x8] sm:$0xff]
        %v611 = vld [vmem:[#allocation2 + $0x10] sm:$0xff]
        %v612 = vld [vmem:[#allocation2 + $0x18] sm:$0xff]
        %v613 = vld [vmem:[#allocation2 + $0x20] sm:$0xff]
        %v614 = vld [vmem:[#allocation2 + $0x28] sm:$0xff]
        %v615 = vld [vmem:[#allocation2 + $0x30] sm:$0xff]
        %v616 = vld [vmem:[#allocation2 + $0x38] sm:$0xff]
        %v617 = vpack.c.bf16 %v595, %v593
        %v618 = vpack.c.bf16 %v596, %v594
        %v619 = vpack.c.bf16 %v599, %v597
        %v620 = vpack.c.bf16 %v600, %v598
        %v621 = vpack.c.bf16 %v603, %v601
        %v622 = vpack.c.bf16 %v604, %v602
        %v623 = vpack.c.bf16 %v607, %v605
        %v624 = vpack.c.bf16 %v608, %v606
        %v625 = vld [vmem:[%s336] sm:$0xf]
        %v626 = vld [vmem:[%s336 + $0x4] sm:$0xf]
        %v627 = vld [vmem:[%s336 + $0x8] sm:$0xf]
        %v628 = vld [vmem:[%s336 + $0xc] sm:$0xf]
        %v629 = vld [vmem:[%s336 + $0x10] sm:$0xf]
        %v630 = vld [vmem:[%s336 + $0x14] sm:$0xf]
        %v631 = vld [vmem:[%s336 + $0x18] sm:$0xf]
        %v632 = vld [vmem:[%s336 + $0x1c] sm:$0xf]
        %v633 = vld [vmem:[%s336 + $0x20] sm:$0xf]
        %v634 = vld [vmem:[%s336 + $0x24] sm:$0xf]
        %v635 = vld [vmem:[%s336 + $0x28] sm:$0xf]
        %v636 = vld [vmem:[%s336 + $0x2c] sm:$0xf]
        %v637 = vld [vmem:[%s336 + $0x30] sm:$0xf]
        %v638 = vld [vmem:[%s336 + $0x34] sm:$0xf]
        %v639 = vld [vmem:[%s336 + $0x38] sm:$0xf]
        %v640 = vld [vmem:[%s336 + $0x3c] sm:$0xf]
        %v641 = vld [vmem:[%s336 + $0x40] sm:$0xf]
        %v642 = vld [vmem:[%s336 + $0x44] sm:$0xf]
        %v643 = vld [vmem:[%s336 + $0x48] sm:$0xf]
        %v644 = vld [vmem:[%s336 + $0x4c] sm:$0xf]
        %v645 = vld [vmem:[%s336 + $0x50] sm:$0xf]
        %v646 = vld [vmem:[%s336 + $0x54] sm:$0xf]
        %v647 = vld [vmem:[%s336 + $0x58] sm:$0xf]
        %v648 = vld [vmem:[%s336 + $0x5c] sm:$0xf]
        %v649 = vld [vmem:[%s336 + $0x60] sm:$0xf]
        %v650 = vld [vmem:[%s336 + $0x64] sm:$0xf]
        %v651 = vld [vmem:[%s336 + $0x68] sm:$0xf]
        %v652 = vld [vmem:[%s336 + $0x6c] sm:$0xf]
        %v653 = vld [vmem:[%s336 + $0x70] sm:$0xf]
        %v654 = vld [vmem:[%s336 + $0x74] sm:$0xf]
        %v655 = vld [vmem:[%s336 + $0x78] sm:$0xf]
        %v656 = vld [vmem:[%s336 + $0x7c] sm:$0xf]
        %v689 = vunpack.c.l.b16 %v625
        %v690 = vunpack.c.l.b16 %v626
        %v691 = vunpack.c.l.b16 %v627
        %v692 = vunpack.c.l.b16 %v628
        %v693 = vunpack.c.l.b16 %v629
        %v694 = vunpack.c.l.b16 %v630
        %v695 = vunpack.c.l.b16 %v631
        %v696 = vunpack.c.l.b16 %v632
        %v697 = vunpack.c.l.b16 %v633
        %v698 = vunpack.c.l.b16 %v634
        %v699 = vunpack.c.l.b16 %v635
        %v700 = vunpack.c.l.b16 %v636
        %v701 = vunpack.c.l.b16 %v637
        %v702 = vunpack.c.l.b16 %v638
        %v703 = vunpack.c.l.b16 %v639
        %v704 = vunpack.c.l.b16 %v640
        %v705 = vunpack.c.l.b16 %v641
        %v706 = vunpack.c.l.b16 %v642
        %v707 = vunpack.c.l.b16 %v643
        %v708 = vunpack.c.l.b16 %v644
        %v709 = vunpack.c.l.b16 %v645
        %v710 = vunpack.c.l.b16 %v646
        %v711 = vunpack.c.l.b16 %v647
        %v712 = vunpack.c.l.b16 %v648
        %v713 = vunpack.c.l.b16 %v649
        %v714 = vunpack.c.l.b16 %v650
        %v715 = vunpack.c.l.b16 %v651
        %v716 = vunpack.c.l.b16 %v652
        %v717 = vunpack.c.l.b16 %v653
        %v718 = vunpack.c.l.b16 %v654
        %v719 = vunpack.c.l.b16 %v655
        %v720 = vunpack.c.l.b16 %v656
        %v721 = vpack.c.b16 %v690, %v689
        %v722 = vpack.c.b16 %v692, %v691
        %v723 = vpack.c.b16 %v694, %v693
        %v724 = vpack.c.b16 %v696, %v695
        %v725 = vpack.c.b16 %v698, %v697
        %v726 = vpack.c.b16 %v700, %v699
        %v727 = vpack.c.b16 %v702, %v701
        %v728 = vpack.c.b16 %v704, %v703
        %v729 = vpack.c.b16 %v706, %v705
        %v730 = vpack.c.b16 %v708, %v707
        %v731 = vpack.c.b16 %v710, %v709
        %v732 = vpack.c.b16 %v712, %v711
        %v733 = vpack.c.b16 %v714, %v713
        %v734 = vpack.c.b16 %v716, %v715
        %v735 = vpack.c.b16 %v718, %v717
        %v736 = vpack.c.b16 %v720, %v719
        %753 = vmatprep.subr.bf16.mxu0 0
        %754 = vmatpush1.bf16.msra.mxu0 %v721
        %755 = vmatprep.subr.bf16.mxu0 0
        %756 = vmatpush1.bf16.msra.mxu0 %v722
        %757 = vmatprep.subr.bf16.mxu0 0
        %758 = vmatpush1.bf16.msra.mxu0 %v723
        %759 = vmatprep.subr.bf16.mxu0 0
        %760 = vmatpush1.bf16.msra.mxu0 %v724
        %761 = vmatprep.subr.bf16.mxu0 0
        %762 = vmatpush1.bf16.msra.mxu0 %v725
        %763 = vmatprep.subr.bf16.mxu0 0
        %764 = vmatpush1.bf16.msra.mxu0 %v726
        %765 = vmatprep.subr.bf16.mxu0 0
        %766 = vmatpush1.bf16.msra.mxu0 %v727
        %767 = vmatprep.subr.bf16.mxu0 0
        %768 = vmatpush1.bf16.msra.mxu0 %v728
        %769 = vmatprep.subr.bf16.mxu0 0
        %770 = vmatpush1.bf16.msra.mxu0 %v729
        %771 = vmatprep.subr.bf16.mxu0 0
        %772 = vmatpush1.bf16.msra.mxu0 %v730
        %773 = vmatprep.subr.bf16.mxu0 0
        %774 = vmatpush1.bf16.msra.mxu0 %v731
        %775 = vmatprep.subr.bf16.mxu0 0
        %776 = vmatpush1.bf16.msra.mxu0 %v732
        %777 = vmatprep.subr.bf16.mxu0 0
        %778 = vmatpush1.bf16.msra.mxu0 %v733
        %779 = vmatprep.subr.bf16.mxu0 0
        %780 = vmatpush1.bf16.msra.mxu0 %v734
        %781 = vmatprep.subr.bf16.mxu0 0
        %782 = vmatpush1.bf16.msra.mxu0 %v735
        %783 = vmatprep.subr.bf16.mxu0 0
        %784 = vmatpush1.bf16.msra.mxu0 %v736
        %785 = vmatprep.mubr.bf16.mxu0 %v618
        %786 = vmatmul.mubr.bf16.gmra.mrb[0].mxu0 %v617
        %v787 = vpop.f32.mrb[0].mxu0
        %v788 = vadd.f32 0.0, %v787
        %v789 = vpop.f32.mrb[0].mxu0
        %v790 = vpop.f32.mrb[0].mxu0
        %v791 = vadd.f32 0.0, %v790
        %v792 = vpop.f32.mrb[0].mxu0
        %793 = vmatprep.mubr.bf16.mxu0 %v620
        %794 = vmatmul.mubr.bf16.gmra.mrb[0].mxu0 %v619
        %v795 = vpop.f32.mrb[0].mxu0
        %v796 = vadd.f32 0.0, %v795
        %v797 = vpop.f32.mrb[0].mxu0
        %v798 = vpop.f32.mrb[0].mxu0
        %v799 = vadd.f32 0.0, %v798
        %v800 = vpop.f32.mrb[0].mxu0
        %801 = vmatprep.mubr.bf16.mxu0 %v622
        %802 = vmatmul.mubr.bf16.gmra.mrb[0].mxu0 %v621
        %v803 = vpop.f32.mrb[0].mxu0
        %v804 = vadd.f32 0.0, %v803
        %v805 = vpop.f32.mrb[0].mxu0
        %v806 = vpop.f32.mrb[0].mxu0
        %v807 = vadd.f32 0.0, %v806
        %v808 = vpop.f32.mrb[0].mxu0
        %809 = vmatprep.mubr.bf16.mxu0 %v624
        %810 = vmatmul.mubr.bf16.gmra.mrb[0].mxu0 %v623
        %v811 = vpop.f32.mrb[0].mxu0
        %v812 = vadd.f32 0.0, %v811
        %v813 = vpop.f32.mrb[0].mxu0
        %v814 = vpop.f32.mrb[0].mxu0
        %v815 = vadd.f32 0.0, %v814
        %v816 = vpop.f32.mrb[0].mxu0
        %817 = vdwg.mxu0
        %v818 = vadd.f32 %v609, %v788
        %v819 = vadd.f32 %v610, %v791
        %v820 = vadd.f32 %v611, %v796
        %v821 = vadd.f32 %v612, %v799
        %v822 = vadd.f32 %v613, %v804
        %v823 = vadd.f32 %v614, %v807
        %v824 = vadd.f32 %v615, %v812
        %v825 = vadd.f32 %v616, %v815
        %826 = vst [vmem:[#allocation2] sm:$0xff] %v818
        %827 = vst [vmem:[#allocation2 + $0x8] sm:$0xff] %v819
        %828 = vst [vmem:[#allocation2 + $0x10] sm:$0xff] %v820
        %829 = vst [vmem:[#allocation2 + $0x18] sm:$0xff] %v821
        %830 = vst [vmem:[#allocation2 + $0x20] sm:$0xff] %v822
        %831 = vst [vmem:[#allocation2 + $0x28] sm:$0xff] %v823
        %832 = vst [vmem:[#allocation2 + $0x30] sm:$0xff] %v824
        %833 = vst [vmem:[#allocation2 + $0x38] sm:$0xff] %v825
        %p834 = scmp.eq.s32.totalorder %s33, 1
        // Predicated region
        $region65: #{tpu_custom_call.1} parent=39 // pred_check
          %p835 = pneg %p834
        $region66: #{tpu_custom_call.1} parent=39 // pred_check_branch
          %837 = sbr.rel (%p835) target = $region68
        $region67: #{tpu_custom_call.1} parent=39 // pred_region
          %v838 = vld [vmem:[#allocation2] sm:$0xff]
          %v839 = vld [vmem:[#allocation2 + $0x8] sm:$0xff]
          %v840 = vld [vmem:[#allocation2 + $0x10] sm:$0xff]
          %v841 = vld [vmem:[#allocation2 + $0x18] sm:$0xff]
          %v842 = vld [vmem:[#allocation2 + $0x20] sm:$0xff]
          %v843 = vld [vmem:[#allocation2 + $0x28] sm:$0xff]
          %v844 = vld [vmem:[#allocation2 + $0x30] sm:$0xff]
          %v845 = vld [vmem:[#allocation2 + $0x38] sm:$0xff]
          %v846 = vld [vmem:[#allocation11] sm:$0x1]
          %v848 = vlaneseq
          %v849 = vshrl.u32 %v848, 7
          %v850 = vsub.s32 0, %v849
          %v851 = vrot.slane %v846, %v850
          %v853 = vadd.f32 %v838, %v851
          %v854 = vadd.f32 %v839, %v851
          %v855 = vadd.f32 %v840, %v851
          %v856 = vadd.f32 %v841, %v851
          %v857 = vadd.f32 %v842, %v851
          %v858 = vadd.f32 %v843, %v851
          %v859 = vadd.f32 %v844, %v851
          %v860 = vadd.f32 %v845, %v851
          %861 = vst [vmem:[%s381] sm:$0xff] %v853
          %862 = vst [vmem:[%s381 + $0x8] sm:$0xff] %v854
          %863 = vst [vmem:[%s381 + $0x10] sm:$0xff] %v855
          %864 = vst [vmem:[%s381 + $0x18] sm:$0xff] %v856
          %865 = vst [vmem:[%s381 + $0x20] sm:$0xff] %v857
          %866 = vst [vmem:[%s381 + $0x28] sm:$0xff] %v858
          %867 = vst [vmem:[%s381 + $0x30] sm:$0xff] %v859
          %868 = vst [vmem:[%s381 + $0x38] sm:$0xff] %v860
        $region68: #{tpu_custom_call.1} parent=39 // pred_fallthru
          _
        %s869 = sand.u32 %s173, 1
        %s870 = scalar_lea.sflag [#allocation5], %s869
        %s871 = sand.u32 %s173, 1
        %s872 = smul.addr %s871, 64
        %s873 = scalar_lea.vmem [#allocation12], %s872
        // Predicated region
        $region69: #{tpu_custom_call.1} parent=39 // pred_check
          %p874 = pneg %p183
        $region70: #{tpu_custom_call.1} parent=39 // pred_check_branch
          %876 = sbr.rel (%p874) target = $region72
        $region71: #{tpu_custom_call.1} parent=39 // pred_region
          %s877 = smul.u32 8, %s32
          %s879 = ssub.s32 1024, 1024
          %880 = vsyncadd %s870, %s879
          %s881 = smul.addr %s877, 128
          %s882 = scalar_lea.hbm %s5, %s881
          %s883 = sshll.u32 %s873, 4
          %s884 = int_to_ptr.vmem [resolvable:$true] %s883
          %889 = dma.vmem_to_hbm [thread:$0]  %s884, 1024, %s882, %s870, 128, 128, 8
        $region72: #{tpu_custom_call.1} parent=39 // pred_fallthru
          _
      $region40: #{tpu_custom_call.1} parent=5 // pred_fallthru
        _
      %p890 = scmp.le.s32.totalorder 2, %s23
      // Predicated region
      $region73: #{tpu_custom_call.1} parent=5 // pred_check
        %p891 = pneg %p890
      $region74: #{tpu_custom_call.1} parent=5 // pred_check_branch
        %893 = sbr.rel (%p891) target = $region76
      $region75: #{tpu_custom_call.1} parent=5 // pred_region
        %s894 = ssub.s32 %s23, 2
        // Predicated region
        $region77: #{tpu_custom_call.1} parent=75 // pred_check
          %p895 = pneg %p189
        $region78: #{tpu_custom_call.1} parent=75 // pred_check_branch
          %897 = sbr.rel (%p895) target = $region80
        $region79: #{tpu_custom_call.1} parent=75 // pred_region
          %s898 = sand.u32 %s174, 1
          %s899 = scalar_lea.sflag [#allocation5], %s898
          %s900 = sand.u32 %s174, 1
          %s901 = smul.addr %s900, 64
          %s902 = scalar_lea.vmem [#allocation12], %s901
          %903 = dma.done %s899, 1024
        $region80: #{tpu_custom_call.1} parent=75 // pred_fallthru
          _
      $region76: #{tpu_custom_call.1} parent=5 // pred_fallthru
        _
    $region6: #{tpu_custom_call.1} parent=1 // loop_footer
      %s27 = sadd.s32 1, %s23
    $region7: #{tpu_custom_call.1} parent=1 // loop_footer_branch
      %22 = sbr.rel target = $region3
    $region8: #{tpu_custom_call.1} parent=1 // loop_exit
      _
    %904 = vsyncpa [#allocation4], 1
    %s905 = scalar_lea.sflag [#allocation4], 1
    %906 = vsyncpa %s905, 1
    %907 = vsyncpa [#allocation7], 1
    %s908 = scalar_lea.sflag [#allocation7], 1
    %909 = vsyncpa %s908, 1
    %910 = vsyncpa [#allocation10], 1
    %s911 = scalar_lea.sflag [#allocation10], 1
    %912 = vsyncpa %s911, 1
    %913 = vsyncpa [#allocation5], 1
    %s914 = scalar_lea.sflag [#allocation5], 1
    %915 = vsyncpa %s914, 1

</llo_original>
